<compile_context>
chip_gen: v6e
topology: v6e:2x2x1
jax: 0.10.0
libtpu: 0.0.40
codegen_flags: <defaults>
</compile_context>

<pallas_src>
import functools

import jax
import jax.numpy as jnp
from jax.experimental import pallas as pl
from jax.experimental.pallas import tpu as pltpu


def _round_up(x: int, m: int) -> int:
    return ((x + m - 1) // m) * m


def _cdiv(a: int, b: int) -> int:
    return (a + b - 1) // b


_HAS_BUFFERED = hasattr(pl, "Buffered")


def _block_spec(shape, index_map, *, single_buffer=False):
    """BlockSpec helper; single_buffer=True requests a 1-deep pipeline buffer
    (for operands whose block index never changes, e.g. resident weights)."""
    if single_buffer and _HAS_BUFFERED:
        try:
            return pl.BlockSpec(shape, index_map, pipeline_mode=pl.Buffered(1))
        except TypeError:  # older jax without the pipeline_mode kwarg
            pass
    return pl.BlockSpec(shape, index_map)


def _mlp_kernel(x_ref, w1_ref, b1_ref, w2_ref, b2_ref, o_ref, acc_ref):
    """One (batch-tile, hidden-slab) step of  relu(x@W1 + b1) @ W2 + b2."""
    k = pl.program_id(1)

    @pl.when(k == 0)
    def _():
        acc_ref[...] = jnp.zeros_like(acc_ref)

    # Layer 1 (MXU, f32 accumulation) + bias + ReLU (VPU) on this hidden slab.
    h = jnp.dot(x_ref[...], w1_ref[...], preferred_element_type=jnp.float32)
    h = jnp.maximum(h + b1_ref[...], 0.0)

    # Layer 2 partial product, accumulated over hidden slabs.
    acc_ref[...] += jnp.dot(h.astype(w2_ref.dtype), w2_ref[...],
                            preferred_element_type=jnp.float32)

    @pl.when(k == pl.num_programs(1) - 1)
    def _():
        o_ref[...] = (acc_ref[...] + b2_ref[...]).astype(o_ref.dtype)


def _pad_2d(a, shape):
    """Zero-pad a 2-D array to `shape`; no copy if already that shape."""
    if tuple(a.shape) == tuple(shape):
        return a
    return jnp.zeros(shape, a.dtype).at[: a.shape[0], : a.shape[1]].set(a)


def _default_vmem_budget() -> int:
    cap = 64 * 1024 * 1024  # conservative fallback: v7x per-TC VMEM
    try:
        info = pltpu.get_tpu_info()
        cap = int(getattr(info, "vmem_capacity_bytes", cap)) or cap
    except Exception:
        pass
    # ~65% of physical VMEM -> headroom for Mosaic internal scratch.
    return int(cap * 0.65)


@functools.partial(jax.jit,
                   static_argnames=("max_batch_tile", "vmem_budget_bytes"))
def _mlp_forward_impl(x, w1, b1, w2, b2, *, max_batch_tile, vmem_budget_bytes):
    B, in_dim = x.shape
    hidden = w1.shape[1]
    out_dim = w2.shape[1]
    dtype = x.dtype
    itemsize = jnp.dtype(dtype).itemsize

    # Lane-dense (multiple-of-128) feature dims; zero padding is exact:
    # padded rows/cols contribute 0 through both matmuls and the ReLU.
    in_p = _round_up(in_dim, 128)
    hid_p = _round_up(hidden, 128)
    out_p = _round_up(out_dim, 128)

    # Sublane granularity for the batch tile (8 rows f32, 16 rows bf16).
    row_align = 16 if itemsize == 2 else 8
    b_req = _round_up(B, row_align)

    def vmem_estimate(tb: int, th: int, num_k: int) -> int:
        nbuf_w = 1 if num_k == 1 else 2        # resident vs. streamed weights
        x_b = 2 * tb * in_p * itemsize                              # x tile
        w_b = nbuf_w * (in_p * th + th * out_p + th) * itemsize     # w1,w2,b1
        b2_b = out_p * itemsize                                     # b2
        out_b = 2 * tb * out_p * itemsize                           # out tile
        acc_b = tb * out_p * 4                                      # f32 acc
        h_b = tb * th * 4                                           # f32 hidden
        return x_b + w_b + b2_b + out_b + acc_b + h_b

    # --- Hidden (contraction) tiling: shrink TH until the weights fit. ------
    th = hid_p
    while th > 128 and vmem_estimate(
            row_align, th, 1 if th == hid_p else 2) > vmem_budget_bytes:
        th = max(128, _round_up(th // 2, 128))
    hid_p = _round_up(hid_p, th)          # make TH divide the padded hidden
    num_k = hid_p // th
    resident = num_k == 1
    # TODO(synk): very large in_dim/out_dim would additionally need tiling of
    # the non-contraction weight dims; not needed for this module's sizes.

    # --- Batch tiling: largest TB the budget allows. --------------------------
    tb = min(_round_up(max_batch_tile, row_align), b_req)
    if tb > 256:
        tb = (tb // 128) * 128            # MXU-friendly LHS panel height
    while tb > row_align and vmem_estimate(tb, th, num_k) > vmem_budget_bytes:
        tb = tb - 128 if tb > 256 else tb - row_align
    tb = max(tb, row_align)
    # Give both v7x TensorCores work when the whole batch fits one tile
    # (only when weights are resident, so no extra weight HBM traffic).
    if resident and tb >= b_req and b_req >= 2 * row_align:
        tb = _round_up(_cdiv(b_req, 2), row_align)

    B_p = _round_up(B, tb)
    num_b = B_p // tb

    # --- Zero-pad operands (no copy if already aligned). ----------------------
    x_p = _pad_2d(x, (B_p, in_p))
    w1_p = _pad_2d(w1, (in_p, hid_p))
    b1_p = _pad_2d(b1, (1, hid_p))
    w2_p = _pad_2d(w2, (hid_p, out_p))
    b2_p = _pad_2d(b2, (1, out_p))

    flops = 2 * B_p * (in_p * hid_p + hid_p * out_p)
    w_bytes = (in_p * hid_p + hid_p * out_p + hid_p) * itemsize
    bytes_accessed = (itemsize * (B_p * in_p + out_p + B_p * out_p)
                      + w_bytes * (1 if resident else num_b))

    out_arr = pl.pallas_call(
        _mlp_kernel,
        out_shape=jax.ShapeDtypeStruct((B_p, out_p), dtype),
        grid=(num_b, num_k),
        in_specs=[
            # x tile: constant over k, pipelined across batch tiles.
            # (If profiling shows exposed x DMA in the mem-bound regime,
            #  deepen this to pl.Buffered(3) with the VMEM reclaimed above.)
            _block_spec((tb, in_p), lambda i, k: (i, 0)),
            _block_spec((in_p, th), lambda i, k: (0, k), single_buffer=resident),
            _block_spec((1, th), lambda i, k: (0, k), single_buffer=resident),
            _block_spec((th, out_p), lambda i, k: (k, 0), single_buffer=resident),
            _block_spec((1, out_p), lambda i, k: (0, 0), single_buffer=True),
        ],
        out_specs=pl.BlockSpec((tb, out_p), lambda i, k: (i, 0)),
        scratch_shapes=[pltpu.VMEM((tb, out_p), jnp.float32)],
        compiler_params=pltpu.CompilerParams(
            dimension_semantics=("parallel", "arbitrary"),
            vmem_limit_bytes=vmem_budget_bytes + vmem_budget_bytes // 4,
        ),
        cost_estimate=pl.CostEstimate(
            flops=flops, transcendentals=0, bytes_accessed=bytes_accessed),
    )(x_p, w1_p, b1_p, w2_p, b2_p)

    if B_p == B and out_p == out_dim:
        return out_arr
    return out_arr[:B, :out_dim]


def mlp_forward(x, w1, b1, w2, b2, *, max_batch_tile=512,
                vmem_budget_bytes=None):
    """MLP forward: relu(x @ w1 + b1) @ w2 + b2.

    x: [..., in_dim]; w1: [in_dim, hidden]; b1: [1, hidden];
    w2: [hidden, out_dim]; b2: [1, out_dim]  ->  [..., out_dim].
    """
    if vmem_budget_bytes is None:
        vmem_budget_bytes = _default_vmem_budget()
    lead = x.shape[:-1]
    x2 = x.reshape(-1, x.shape[-1])
    y = _mlp_forward_impl(x2, w1, b1, w2, b2,
                          max_batch_tile=int(max_batch_tile),
                          vmem_budget_bytes=int(vmem_budget_bytes))
    return y.reshape(*lead, w2.shape[1])


def init_linear_params(key, fan_in, fan_out, dtype=jnp.float32):
    """torch nn.Linear default init: U(-1/sqrt(fan_in), 1/sqrt(fan_in)).
    Weight stored [in, out] so the kernel computes x @ W."""
    kw, kb = jax.random.split(key)
    bound = fan_in ** -0.5
    w = jax.random.uniform(kw, (fan_in, fan_out), dtype, -bound, bound)
    b = jax.random.uniform(kb, (1, fan_out), dtype, -bound, bound)
    return w, b


def mlp_reference(x, w1, b1, w2, b2):
    h = jnp.maximum(x @ w1 + b1, 0.0)
    return h @ w2 + b2


if __name__ == "__main__":
    # Small shapes consistent with MLP(in_dim, hidden_dim, out_dim)
    batch, in_dim, hidden_dim, out_dim = 8, 32, 64, 16

    key = jax.random.PRNGKey(0)
    kx, k1, k2 = jax.random.split(key, 3)

    x = jax.random.normal(kx, (batch, in_dim), jnp.float32)
    w1, b1 = init_linear_params(k1, in_dim, hidden_dim)
    w2, b2 = init_linear_params(k2, hidden_dim, out_dim)

    out = mlp_forward(x, w1, b1, w2, b2)
    out = jax.block_until_ready(out)

    ref = mlp_reference(x, w1, b1, w2, b2)
    assert out.shape == (batch, out_dim)
    assert jnp.allclose(out, ref, atol=1e-5, rtol=1e-5), "mismatch vs reference"

    print("KERNEL_OK")
</pallas_src>

<mosaic_0001>
module attributes {stable_mosaic.version = 11 : i64} {
  func.func @_mlp_kernel(%arg0: i32, %arg1: i32, %arg2: memref<8x128xf32, #tpu.memory_space<vmem>>, %arg3: memref<128x128xf32, #tpu.memory_space<vmem>>, %arg4: memref<1x128xf32, #tpu.memory_space<vmem>>, %arg5: memref<128x128xf32, #tpu.memory_space<vmem>>, %arg6: memref<1x128xf32, #tpu.memory_space<vmem>>, %arg7: memref<8x128xf32, #tpu.memory_space<vmem>>, %arg8: memref<8x128xf32, #tpu.memory_space<vmem>>) attributes {dimension_semantics = [#tpu.dimension_semantics<parallel>, #tpu.dimension_semantics<arbitrary>], iteration_bounds = array<i64: 1, 1>, scalar_prefetch = 0 : i64, scratch_operands = 1 : i64, tpu.core_type = #tpu.core_type<tc>, window_params = [{transform_indices = @transform_0, window_bounds = array<i64: 8, 128>}, {pipeline_mode = #tpu.pipeline_mode<synchronous>, transform_indices = @transform_1, window_bounds = array<i64: 128, 128>}, {pipeline_mode = #tpu.pipeline_mode<synchronous>, transform_indices = @transform_2, window_bounds = array<i64: 1, 128>}, {pipeline_mode = #tpu.pipeline_mode<synchronous>, transform_indices = @transform_3, window_bounds = array<i64: 128, 128>}, {pipeline_mode = #tpu.pipeline_mode<synchronous>, transform_indices = @transform_4, window_bounds = array<i64: 1, 128>}, {transform_indices = @transform_5, window_bounds = array<i64: 8, 128>}]} {
    %c0_i32 = arith.constant 0 : i32
    %0 = arith.cmpi eq, %arg1, %c0_i32 : i32
    %1 = arith.extui %0 : i1 to i32
    %c0_i32_0 = arith.constant 0 : i32
    %2 = arith.cmpi ne, %1, %c0_i32_0 : i32
    scf.if %2 {
      %cst_16 = arith.constant 0.000000e+00 : f32
      %19 = vector.broadcast %cst_16 : f32 to vector<8x128xf32>
      %c0_17 = arith.constant 0 : index
      %c0_18 = arith.constant 0 : index
      %20 = vector.load %arg8[%c0_17, %c0_18] : memref<8x128xf32, #tpu.memory_space<vmem>>, vector<8x128xf32>
      tpu.vector_store %arg8[%c0_17, %c0_18], %19 {strides = array<i32>} : memref<8x128xf32, #tpu.memory_space<vmem>>, vector<8x128xf32>,
    } else {
    }
    %c0 = arith.constant 0 : index
    %c0_1 = arith.constant 0 : index
    %3 = vector.load %arg2[%c0, %c0_1] : memref<8x128xf32, #tpu.memory_space<vmem>>, vector<8x128xf32>
    %c0_2 = arith.constant 0 : index
    %c0_3 = arith.constant 0 : index
    %4 = vector.load %arg3[%c0_2, %c0_3] : memref<128x128xf32, #tpu.memory_space<vmem>>, vector<128x128xf32>
    %cst = arith.constant dense<0.000000e+00> : vector<8x128xf32>
    %5 = tpu.matmul %3, %4, %cst {dimension_numbers = #tpu.dot_dimension_numbers<[1], [0], [0], [1], [0, 0, 1, 1], [], []>} : vector<8x128xf32>, vector<128x128xf32>, vector<8x128xf32> -> vector<8x128xf32>
    %c0_4 = arith.constant 0 : index
    %c0_5 = arith.constant 0 : index
    %6 = vector.load %arg4[%c0_4, %c0_5] : memref<1x128xf32, #tpu.memory_space<vmem>>, vector<1x128xf32>
    %7 = vector.broadcast %6 : vector<1x128xf32> to vector<8x128xf32>
    %8 = arith.addf %5, %7 : vector<8x128xf32>
    %cst_6 = arith.constant 0.000000e+00 : f32
    %9 = vector.broadcast %cst_6 : f32 to vector<8x128xf32>
    %10 = arith.maximumf %8, %9 : vector<8x128xf32>
    %c0_7 = arith.constant 0 : index
    %c0_8 = arith.constant 0 : index
    %11 = vector.load %arg8[%c0_7, %c0_8] : memref<8x128xf32, #tpu.memory_space<vmem>>, vector<8x128xf32>
    %c0_9 = arith.constant 0 : index
    %c0_10 = arith.constant 0 : index
    %12 = vector.load %arg5[%c0_9, %c0_10] : memref<128x128xf32, #tpu.memory_space<vmem>>, vector<128x128xf32>
    %cst_11 = arith.constant dense<0.000000e+00> : vector<8x128xf32>
    %13 = tpu.matmul %10, %12, %cst_11 {dimension_numbers = #tpu.dot_dimension_numbers<[1], [0], [0], [1], [0, 0, 1, 1], [], []>} : vector<8x128xf32>, vector<128x128xf32>, vector<8x128xf32> -> vector<8x128xf32>
    %14 = arith.addf %11, %13 : vector<8x128xf32>
    %c0_12 = arith.constant 0 : index
    %c0_13 = arith.constant 0 : index
    %15 = vector.load %arg8[%c0_12, %c0_13] : memref<8x128xf32, #tpu.memory_space<vmem>>, vector<8x128xf32>
    tpu.vector_store %arg8[%c0_12, %c0_13], %14 {strides = array<i32>} : memref<8x128xf32, #tpu.memory_space<vmem>>, vector<8x128xf32>,
    %c0_i32_14 = arith.constant 0 : i32
    %16 = arith.cmpi eq, %arg1, %c0_i32_14 : i32
    %17 = arith.extui %16 : i1 to i32
    %c0_i32_15 = arith.constant 0 : i32
    %18 = arith.cmpi ne, %17, %c0_i32_15 : i32
    scf.if %18 {
      %c0_16 = arith.constant 0 : index
      %c0_17 = arith.constant 0 : index
      %19 = vector.load %arg8[%c0_16, %c0_17] : memref<8x128xf32, #tpu.memory_space<vmem>>, vector<8x128xf32>
      %c0_18 = arith.constant 0 : index
      %c0_19 = arith.constant 0 : index
      %20 = vector.load %arg6[%c0_18, %c0_19] : memref<1x128xf32, #tpu.memory_space<vmem>>, vector<1x128xf32>
      %21 = vector.broadcast %20 : vector<1x128xf32> to vector<8x128xf32>
      %22 = arith.addf %19, %21 : vector<8x128xf32>
      %c0_20 = arith.constant 0 : index
      %c0_21 = arith.constant 0 : index
      %23 = vector.load %arg7[%c0_20, %c0_21] : memref<8x128xf32, #tpu.memory_space<vmem>>, vector<8x128xf32>
      tpu.vector_store %arg7[%c0_20, %c0_21], %22 {strides = array<i32>} : memref<8x128xf32, #tpu.memory_space<vmem>>, vector<8x128xf32>,
    } else {
    }
    return
  }
  func.func @transform_0(%arg0: i32, %arg1: i32) -> (i32, i32) {
    %c0_i32 = arith.constant 0 : i32
    %c0_i32_0 = arith.constant 0 : i32
    return %arg0, %c0_i32 : i32, i32
  }
  func.func @transform_1(%arg0: i32, %arg1: i32) -> (i32, i32) {
    %c0_i32 = arith.constant 0 : i32
    %c0_i32_0 = arith.constant 0 : i32
    return %c0_i32, %arg1 : i32, i32
  }
  func.func @transform_2(%arg0: i32, %arg1: i32) -> (i32, i32) {
    %c0_i32 = arith.constant 0 : i32
    %c0_i32_0 = arith.constant 0 : i32
    return %c0_i32, %arg1 : i32, i32
  }
  func.func @transform_3(%arg0: i32, %arg1: i32) -> (i32, i32) {
    %c0_i32 = arith.constant 0 : i32
    %c0_i32_0 = arith.constant 0 : i32
    return %arg1, %c0_i32 : i32, i32
  }
  func.func @transform_4(%arg0: i32, %arg1: i32) -> (i32, i32) {
    %c0_i32 = arith.constant 0 : i32
    %c0_i32_0 = arith.constant 0 : i32
    %c0_i32_1 = arith.constant 0 : i32
    return %c0_i32, %c0_i32_0 : i32, i32
  }
  func.func @transform_5(%arg0: i32, %arg1: i32) -> (i32, i32) {
    %c0_i32 = arith.constant 0 : i32
    %c0_i32_0 = arith.constant 0 : i32
    return %arg0, %c0_i32 : i32, i32
  }
}

</mosaic_0001>

<llo_original>
// kernel: _mlp_forward_impl.1
$region0: #{_mlp_forward_impl.1}
  #allocation0 [shape = 'u32[]', space=smem, size = 0x4, offset = 0x4, fixed_abs, tag = 'smem constant byte address 0x4 - core index']
  #allocation1 [shape = 'u32[144,128]{1,0:T(1,128)}', space=vmem, size = 0x12000, scoped, tag = 'internal scratch']
  #allocation2 [shape = 'f32[8,128]{1,0:T(8,128)}', space=vmem, size = 0x1000, scoped, tag = 'scratch operand']
  %s0 = inlined_call_operand.vmem [shape: f32[8,128], index: 0, kind: input, shape index: {}]
  %s1 = inlined_call_operand.vmem [shape: f32[128,128], index: 1, kind: input, shape index: {}]
  %s2 = inlined_call_operand.vmem [shape: f32[1,128], index: 2, kind: input, shape index: {}]
  %s3 = inlined_call_operand.vmem [shape: f32[128,128], index: 3, kind: input, shape index: {}]
  %s4 = inlined_call_operand.vmem [shape: f32[1,128], index: 4, kind: input, shape index: {}]
  %s5 = inlined_call_operand.hbm [shape: f32[8,128], index: 5, kind: output, shape index: {}]
  %s6 = sld [smem:[#allocation0]]
  $region38: #{_mlp_forward_impl.1} parent=0
    _
  %s8 = ssub.s32 1, %s6
  %s9 = scalar_select 0, %s8, %s6
  $region1: #{_mlp_forward_impl.1} parent=0
    #allocation3 [shape = 'u8[4096]{0}', space=vmem, size = 0x1000, scoped, tag = 'output window, operand 0, single buffered']
    #allocation4 [shape = 's32[1]{0}', space=sflag, size = 0x4, scoped, tag = 'scoped memory for _mlp_forward_impl.1']
    %10 = vsyncpa [#allocation4], 0
    // Predicated region
    $region2: #{_mlp_forward_impl.1} parent=1 // pred_check
      _
    $region3: #{_mlp_forward_impl.1} parent=1 // pred_check_branch
      %12 = sbr.rel (0) target = $region5
    $region4: #{_mlp_forward_impl.1} parent=1 // pred_region
      _
    $region5: #{_mlp_forward_impl.1} parent=1 // pred_fallthru
      _
    // Predicated region
    $region6: #{_mlp_forward_impl.1} parent=1 // pred_check
      _
    $region7: #{_mlp_forward_impl.1} parent=1 // pred_check_branch
      %14 = sbr.rel (0) target = $region9
    $region8: #{_mlp_forward_impl.1} parent=1 // pred_region
      _
    $region9: #{_mlp_forward_impl.1} parent=1 // pred_fallthru
      _
    // Predicated region
    $region10: #{_mlp_forward_impl.1} parent=1 // pred_check
      _
    $region11: #{_mlp_forward_impl.1} parent=1 // pred_check_branch
      %16 = sbr.rel (0) target = $region13
    $region12: #{_mlp_forward_impl.1} parent=1 // pred_region
      _
    $region13: #{_mlp_forward_impl.1} parent=1 // pred_fallthru
      _
    // Predicated region
    $region14: #{_mlp_forward_impl.1} parent=1 // pred_check
      _
    $region15: #{_mlp_forward_impl.1} parent=1 // pred_check_branch
      %18 = sbr.rel (0) target = $region17
    $region16: #{_mlp_forward_impl.1} parent=1 // pred_region
      _
    $region17: #{_mlp_forward_impl.1} parent=1 // pred_fallthru
      _
    // Predicated region
    $region18: #{_mlp_forward_impl.1} parent=1 // pred_check
      _
    $region19: #{_mlp_forward_impl.1} parent=1 // pred_check_branch
      %20 = sbr.rel (0) target = $region21
    $region20: #{_mlp_forward_impl.1} parent=1 // pred_region
      _
    $region21: #{_mlp_forward_impl.1} parent=1 // pred_fallthru
      _
    %p21 = scmp.eq.s32.totalorder 0, 0
    // Predicated region
    $region22: #{_mlp_forward_impl.1} parent=1 // pred_check
      %p22 = pneg %p21
    $region23: #{_mlp_forward_impl.1} parent=1 // pred_check_branch
      %24 = sbr.rel (%p22) target = $region25
    $region24: #{_mlp_forward_impl.1} parent=1 // pred_region
      %25 = vst [vmem:[#allocation2] sm:$0xff] 0.0
    $region25: #{_mlp_forward_impl.1} parent=1 // pred_fallthru
      _
    %v26 = vld [vmem:[%s0] sm:$0xff]
    %v27 = vld [vmem:[%s1] sm:$0xff]
    %v28 = vld [vmem:[%s1 + $0x8] sm:$0xff]
    %v29 = vld [vmem:[%s1 + $0x10] sm:$0xff]
    %v30 = vld [vmem:[%s1 + $0x18] sm:$0xff]
    %v31 = vld [vmem:[%s1 + $0x20] sm:$0xff]
    %v32 = vld [vmem:[%s1 + $0x28] sm:$0xff]
    %v33 = vld [vmem:[%s1 + $0x30] sm:$0xff]
    %v34 = vld [vmem:[%s1 + $0x38] sm:$0xff]
    %v35 = vld [vmem:[%s1 + $0x40] sm:$0xff]
    %v36 = vld [vmem:[%s1 + $0x48] sm:$0xff]
    %v37 = vld [vmem:[%s1 + $0x50] sm:$0xff]
    %v38 = vld [vmem:[%s1 + $0x58] sm:$0xff]
    %v39 = vld [vmem:[%s1 + $0x60] sm:$0xff]
    %v40 = vld [vmem:[%s1 + $0x68] sm:$0xff]
    %v41 = vld [vmem:[%s1 + $0x70] sm:$0xff]
    %v42 = vld [vmem:[%s1 + $0x78] sm:$0xff]
    %v43 = vld [vmem:[%s2] sm:$0x1]
    %v45 = vlaneseq
    %v46 = vshrl.u32 %v45, 7
    %v47 = vsub.s32 0, %v46
    %v48 = vrot.slane %v43, %v47
    %50 = vmatprep.subr.mxu0 0.0
    %51 = vmatpush1.msra.mxu0 %v42
    %52 = vmatprep.subr.mxu0 0.0
    %53 = vmatpush1.msra.mxu0 %v41
    %54 = vmatprep.subr.mxu0 0.0
    %55 = vmatpush1.msra.mxu0 %v40
    %56 = vmatprep.subr.mxu0 0.0
    %57 = vmatpush1.msra.mxu0 %v39
    %58 = vmatprep.subr.mxu0 0.0
    %59 = vmatpush1.msra.mxu0 %v38
    %60 = vmatprep.subr.mxu0 0.0
    %61 = vmatpush1.msra.mxu0 %v37
    %62 = vmatprep.subr.mxu0 0.0
    %63 = vmatpush1.msra.mxu0 %v36
    %64 = vmatprep.subr.mxu0 0.0
    %65 = vmatpush1.msra.mxu0 %v35
    %66 = vmatprep.subr.mxu0 0.0
    %67 = vmatpush1.msra.mxu0 %v34
    %68 = vmatprep.subr.mxu0 0.0
    %69 = vmatpush1.msra.mxu0 %v33
    %70 = vmatprep.subr.mxu0 0.0
    %71 = vmatpush1.msra.mxu0 %v32
    %72 = vmatprep.subr.mxu0 0.0
    %73 = vmatpush1.msra.mxu0 %v31
    %74 = vmatprep.subr.mxu0 0.0
    %75 = vmatpush1.msra.mxu0 %v30
    %76 = vmatprep.subr.mxu0 0.0
    %77 = vmatpush1.msra.mxu0 %v29
    %78 = vmatprep.subr.mxu0 0.0
    %79 = vmatpush1.msra.mxu0 %v28
    %80 = vmatprep.subr.mxu0 0.0
    %81 = vmatpush1.msra.mxu0 %v27
    %82 = vmatprep.subr.mxu0 0.0
    %83 = vmatpush2.msra.mxu0 0.0
    %84 = vmatprep.subr.mxu0 0.0
    %85 = vmatpush2.msra.mxu0 0.0
    %86 = vmatprep.subr.mxu0 0.0
    %87 = vmatpush2.msra.mxu0 0.0
    %88 = vmatprep.subr.mxu0 0.0
    %89 = vmatpush2.msra.mxu0 0.0
    %90 = vmatprep.subr.mxu0 0.0
    %91 = vmatpush2.msra.mxu0 0.0
    %92 = vmatprep.subr.mxu0 0.0
    %93 = vmatpush2.msra.mxu0 0.0
    %94 = vmatprep.subr.mxu0 0.0
    %95 = vmatpush2.msra.mxu0 0.0
    %96 = vmatprep.subr.mxu0 0.0
    %97 = vmatpush2.msra.mxu0 0.0
    %98 = vmatprep.subr.mxu0 0.0
    %99 = vmatpush2.msra.mxu0 0.0
    %100 = vmatprep.subr.mxu0 0.0
    %101 = vmatpush2.msra.mxu0 0.0
    %102 = vmatprep.subr.mxu0 0.0
    %103 = vmatpush2.msra.mxu0 0.0
    %104 = vmatprep.subr.mxu0 0.0
    %105 = vmatpush2.msra.mxu0 0.0
    %106 = vmatprep.subr.mxu0 0.0
    %107 = vmatpush2.msra.mxu0 0.0
    %108 = vmatprep.subr.mxu0 0.0
    %109 = vmatpush2.msra.mxu0 0.0
    %110 = vmatprep.subr.mxu0 0.0
    %111 = vmatpush2.msra.mxu0 0.0
    %112 = vmatprep.subr.mxu0 0.0
    %113 = vmatpush2.msra.mxu0 0.0
    %114 = vmatprep.mubr.f32.mxu0 0.0
    %115 = vmatmul.mubr.f32.gmra.mxu0 %v26
    %v116 = vpop.f32.mrf.mxu0
    %v117 = vadd.f32 %v48, %v116
    %v118 = vpop.f32.mrf.mxu0
    %119 = vdwg.mxu0
    %v120 = vmax.f32 %v117, 0.0
    %v121 = vld [vmem:[#allocation2] sm:$0xff]
    %v122 = vld [vmem:[%s3] sm:$0xff]
    %v123 = vld [vmem:[%s3 + $0x8] sm:$0xff]
    %v124 = vld [vmem:[%s3 + $0x10] sm:$0xff]
    %v125 = vld [vmem:[%s3 + $0x18] sm:$0xff]
    %v126 = vld [vmem:[%s3 + $0x20] sm:$0xff]
    %v127 = vld [vmem:[%s3 + $0x28] sm:$0xff]
    %v128 = vld [vmem:[%s3 + $0x30] sm:$0xff]
    %v129 = vld [vmem:[%s3 + $0x38] sm:$0xff]
    %v130 = vld [vmem:[%s3 + $0x40] sm:$0xff]
    %v131 = vld [vmem:[%s3 + $0x48] sm:$0xff]
    %v132 = vld [vmem:[%s3 + $0x50] sm:$0xff]
    %v133 = vld [vmem:[%s3 + $0x58] sm:$0xff]
    %v134 = vld [vmem:[%s3 + $0x60] sm:$0xff]
    %v135 = vld [vmem:[%s3 + $0x68] sm:$0xff]
    %v136 = vld [vmem:[%s3 + $0x70] sm:$0xff]
    %v137 = vld [vmem:[%s3 + $0x78] sm:$0xff]
    %138 = vmatprep.subr.mxu0 0.0
    %139 = vmatpush1.msra.mxu0 %v137
    %140 = vmatprep.subr.mxu0 0.0
    %141 = vmatpush1.msra.mxu0 %v136
    %142 = vmatprep.subr.mxu0 0.0
    %143 = vmatpush1.msra.mxu0 %v135
    %144 = vmatprep.subr.mxu0 0.0
    %145 = vmatpush1.msra.mxu0 %v134
    %146 = vmatprep.subr.mxu0 0.0
    %147 = vmatpush1.msra.mxu0 %v133
    %148 = vmatprep.subr.mxu0 0.0
    %149 = vmatpush1.msra.mxu0 %v132
    %150 = vmatprep.subr.mxu0 0.0
    %151 = vmatpush1.msra.mxu0 %v131
    %152 = vmatprep.subr.mxu0 0.0
    %153 = vmatpush1.msra.mxu0 %v130
    %154 = vmatprep.subr.mxu0 0.0
    %155 = vmatpush1.msra.mxu0 %v129
    %156 = vmatprep.subr.mxu0 0.0
    %157 = vmatpush1.msra.mxu0 %v128
    %158 = vmatprep.subr.mxu0 0.0
    %159 = vmatpush1.msra.mxu0 %v127
    %160 = vmatprep.subr.mxu0 0.0
    %161 = vmatpush1.msra.mxu0 %v126
    %162 = vmatprep.subr.mxu0 0.0
    %163 = vmatpush1.msra.mxu0 %v125
    %164 = vmatprep.subr.mxu0 0.0
    %165 = vmatpush1.msra.mxu0 %v124
    %166 = vmatprep.subr.mxu0 0.0
    %167 = vmatpush1.msra.mxu0 %v123
    %168 = vmatprep.subr.mxu0 0.0
    %169 = vmatpush1.msra.mxu0 %v122
    %170 = vmatprep.subr.mxu0 0.0
    %171 = vmatpush2.msra.mxu0 0.0
    %172 = vmatprep.subr.mxu0 0.0
    %173 = vmatpush2.msra.mxu0 0.0
    %174 = vmatprep.subr.mxu0 0.0
    %175 = vmatpush2.msra.mxu0 0.0
    %176 = vmatprep.subr.mxu0 0.0
    %177 = vmatpush2.msra.mxu0 0.0
    %178 = vmatprep.subr.mxu0 0.0
    %179 = vmatpush2.msra.mxu0 0.0
    %180 = vmatprep.subr.mxu0 0.0
    %181 = vmatpush2.msra.mxu0 0.0
    %182 = vmatprep.subr.mxu0 0.0
    %183 = vmatpush2.msra.mxu0 0.0
    %184 = vmatprep.subr.mxu0 0.0
    %185 = vmatpush2.msra.mxu0 0.0
    %186 = vmatprep.subr.mxu0 0.0
    %187 = vmatpush2.msra.mxu0 0.0
    %188 = vmatprep.subr.mxu0 0.0
    %189 = vmatpush2.msra.mxu0 0.0
    %190 = vmatprep.subr.mxu0 0.0
    %191 = vmatpush2.msra.mxu0 0.0
    %192 = vmatprep.subr.mxu0 0.0
    %193 = vmatpush2.msra.mxu0 0.0
    %194 = vmatprep.subr.mxu0 0.0
    %195 = vmatpush2.msra.mxu0 0.0
    %196 = vmatprep.subr.mxu0 0.0
    %197 = vmatpush2.msra.mxu0 0.0
    %198 = vmatprep.subr.mxu0 0.0
    %199 = vmatpush2.msra.mxu0 0.0
    %200 = vmatprep.subr.mxu0 0.0
    %201 = vmatpush2.msra.mxu0 0.0
    %202 = vmatprep.mubr.f32.mxu0 0.0
    %203 = vmatmul.mubr.f32.gmra.mxu0 %v120
    %v204 = vpop.f32.mrf.mxu0
    %v205 = vadd.f32 0.0, %v204
    %v206 = vpop.f32.mrf.mxu0
    %207 = vdwg.mxu0
    %v208 = vadd.f32 %v121, %v205
    %209 = vst [vmem:[#allocation2] sm:$0xff] %v208
    // Predicated region
    $region26: #{_mlp_forward_impl.1} parent=1 // pred_check
      %p210 = pneg %p21
    $region27: #{_mlp_forward_impl.1} parent=1 // pred_check_branch
      %212 = sbr.rel (%p210) target = $region29
    $region28: #{_mlp_forward_impl.1} parent=1 // pred_region
      %v213 = vld [vmem:[#allocation2] sm:$0xff]
      %v214 = vld [vmem:[%s4] sm:$0x1]
      %v216 = vlaneseq
      %v217 = vshrl.u32 %v216, 7
      %v218 = vsub.s32 0, %v217
      %v219 = vrot.slane %v214, %v218
      %v221 = vadd.f32 %v213, %v219
      %222 = vst [vmem:[#allocation3] sm:$0xff] %v221
    $region29: #{_mlp_forward_impl.1} parent=1 // pred_fallthru
      _
    // Predicated region
    $region30: #{_mlp_forward_impl.1} parent=1 // pred_check
      _
    $region31: #{_mlp_forward_impl.1} parent=1 // pred_check_branch
      %224 = sbr.rel (0) target = $region33
    $region32: #{_mlp_forward_impl.1} parent=1 // pred_region
      %s226 = ssub.s32 128, 128
      %227 = vsyncadd [#allocation4], %s226
      %s229 = sshll.u32 [#allocation3], 4
      %s230 = int_to_ptr.vmem [resolvable:$true] %s229
      %232 = dma.vmem_to_hbm [thread:$0]  %s230, 128, %s5, [#allocation4]
    $region33: #{_mlp_forward_impl.1} parent=1 // pred_fallthru
      _
    // Predicated region
    $region34: #{_mlp_forward_impl.1} parent=1 // pred_check
      _
    $region35: #{_mlp_forward_impl.1} parent=1 // pred_check_branch
      %234 = sbr.rel (0) target = $region37
    $region36: #{_mlp_forward_impl.1} parent=1 // pred_region
      %235 = dma.done [#allocation4], 128
    $region37: #{_mlp_forward_impl.1} parent=1 // pred_fallthru
      _
    %236 = vsyncpa [#allocation4], 1

</llo_original>
